<compile_context>
chip_gen: v7x
topology: tpu7x:2x2x1
jax: 0.10.0
libtpu: 0.0.40
codegen_flags: <defaults>
</compile_context>

<pallas_src>
import functools

import jax
import jax.numpy as jnp
from jax.experimental import pallas as pl
from jax.experimental.pallas import tpu as pltpu


def _round_up(x, m):
    return (x + m - 1) // m * m


def _dice_kernel(x_ref, t_ref, inter_ref, bsum_ref):
    """One grid step = one (batch, spatial-tile) pair.

    x_ref     : (1, C, T) VMEM logits tile (T % 128 == 0, lane-dense)
    t_ref     : (1, 1, T) VMEM target tile
    inter_ref : (1, 1, T) per-batch vector accumulator for sum(pred * t)
    bsum_ref  : (1, 1, T) per-batch vector accumulator for sum(t * t)
    """
    s = pl.program_id(1)

    @pl.when(s == 0)
    def _():
        inter_ref[...] = jnp.zeros_like(inter_ref)
        bsum_ref[...] = jnp.zeros_like(bsum_ref)

    x = x_ref[0].astype(jnp.float32)                  # (C, T)
    # sigmoid is monotone -> max over channels commutes with it; reduce first
    # so we pay C-times fewer transcendentals.
    xmax = jnp.max(x, axis=0, keepdims=True)          # (1, T) channel max
    p = 0.5 * jnp.tanh(0.5 * xmax) + 0.5              # sigmoid, single EUP op
    t = t_ref[0].astype(jnp.float32)                  # (1, T)

    # Pure-VPU accumulation into the resident output blocks.
    inter_ref[0] = inter_ref[0] + p * t
    bsum_ref[0] = bsum_ref[0] + t * t


@functools.partial(jax.jit, static_argnames=("lane_tile",))
def dice_loss_pallas(inputs, targets, *, lane_tile=2048):
    """inputs: (B, C, H, W) logits; targets: (B, H, W)."""
    B, C, H, W = inputs.shape
    assert targets.shape == (B, H, W), (inputs.shape, targets.shape)

    hw = H * W
    # Lane-dense spatial tile: multiple of 128, capped (tunable). Double-
    # buffered working set is ~2*(C+1)*tile*4 bytes — a few hundred KiB even
    # for C ~ 20, far below every generation's scoped-VMEM limit.
    tile = min(int(lane_tile), _round_up(hw, 128))
    hw_pad = _round_up(hw, tile)
    num_tiles = hw_pad // tile

    x = inputs.reshape(B, C, hw)
    t = targets.reshape(B, 1, hw)
    if hw_pad != hw:
        # Zero-padded targets contribute 0 to both sums, so padding is exact
        # regardless of what the padded logits are.
        x = jnp.pad(x, ((0, 0), (0, 0), (0, hw_pad - hw)))
        t = jnp.pad(t, ((0, 0), (0, 0), (0, hw_pad - hw)))

    inter_part, bsum_part = pl.pallas_call(
        _dice_kernel,
        out_shape=(
            jax.ShapeDtypeStruct((B, 1, tile), jnp.float32),
            jax.ShapeDtypeStruct((B, 1, tile), jnp.float32),
        ),
        grid_spec=pltpu.PrefetchScalarGridSpec(
            num_scalar_prefetch=0,
            grid=(B, num_tiles),
            in_specs=[
                pl.BlockSpec((1, C, tile), lambda b, s: (b, 0, s)),
                pl.BlockSpec((1, 1, tile), lambda b, s: (b, 0, s)),
            ],
            out_specs=[
                pl.BlockSpec((1, 1, tile), lambda b, s: (b, 0, 0)),
                pl.BlockSpec((1, 1, tile), lambda b, s: (b, 0, 0)),
            ],
        ),
        compiler_params=pltpu.CompilerParams(
            # Batch axis can shard across TensorCores (v7x megacore); the
            # spatial-tile axis is the in-place accumulation axis.
            dimension_semantics=("parallel", "arbitrary"),
        ),
    )(x, t)

    smooth = 1.0
    intersection = jnp.sum(inter_part)   # == A_sum in the reference
    b_sum = jnp.sum(bsum_part)
    return 1.0 - (2.0 * intersection + smooth) / (intersection + b_sum + smooth)


def dice_loss_ref(inputs, targets):
    """Pure-JAX reference mirroring the PyTorch code (sigmoid -> max -> dice)."""
    smooth = 1.0
    p = jax.nn.sigmoid(inputs.astype(jnp.float32))
    pred = jnp.max(p, axis=1)
    iflat = pred.reshape(-1)
    tflat = targets.astype(jnp.float32).reshape(-1)
    intersection = jnp.sum(iflat * tflat)
    a_sum = jnp.sum(tflat * iflat)
    b_sum = jnp.sum(tflat * tflat)
    return 1.0 - (2.0 * intersection + smooth) / (a_sum + b_sum + smooth)


if __name__ == "__main__":
    key = jax.random.PRNGKey(0)
    k1, k2 = jax.random.split(key)

    B, C, H, W = 2, 4, 16, 16
    inputs = jax.random.normal(k1, (B, C, H, W), dtype=jnp.float32)
    # Binary targets (the definition also generalizes to real-valued targets).
    targets = (jax.random.uniform(k2, (B, H, W), dtype=jnp.float32) > 0.5).astype(
        jnp.float32
    )

    out = dice_loss_pallas(inputs, targets)
    out = jax.block_until_ready(out)

    ref = dice_loss_ref(inputs, targets)
    assert jnp.allclose(out, ref, atol=1e-5, rtol=1e-5), (out, ref)

    print("KERNEL_OK")
</pallas_src>

<mosaic_0001>
module attributes {stable_mosaic.version = 11 : i64} {
  func.func @_dice_kernel(%arg0: i32, %arg1: i32, %arg2: memref<1x4x256xf32, #tpu.memory_space<vmem>>, %arg3: memref<1x1x256xf32, #tpu.memory_space<vmem>>, %arg4: memref<1x1x256xf32, #tpu.memory_space<vmem>>, %arg5: memref<1x1x256xf32, #tpu.memory_space<vmem>>) attributes {dimension_semantics = [#tpu.dimension_semantics<parallel>, #tpu.dimension_semantics<arbitrary>], iteration_bounds = array<i64: 2, 1>, scalar_prefetch = 0 : i64, scratch_operands = 0 : i64, tpu.core_type = #tpu.core_type<tc>, window_params = [{transform_indices = @transform_0, window_bounds = array<i64: 1, 4, 256>}, {transform_indices = @transform_1, window_bounds = array<i64: 1, 1, 256>}, {transform_indices = @transform_2, window_bounds = array<i64: 1, 1, 256>}, {transform_indices = @transform_3, window_bounds = array<i64: 1, 1, 256>}]} {
    %c0_i32 = arith.constant 0 : i32
    %0 = arith.cmpi eq, %arg1, %c0_i32 : i32
    %1 = arith.extui %0 : i1 to i32
    %c0_i32_0 = arith.constant 0 : i32
    %2 = arith.cmpi ne, %1, %c0_i32_0 : i32
    scf.if %2 {
      %cst_21 = arith.constant 0.000000e+00 : f32
      %30 = vector.broadcast %cst_21 : f32 to vector<1x1x256xf32>
      %c0_22 = arith.constant 0 : index
      %c0_23 = arith.constant 0 : index
      %c0_24 = arith.constant 0 : index
      %31 = vector.load %arg4[%c0_22, %c0_23, %c0_24] : memref<1x1x256xf32, #tpu.memory_space<vmem>>, vector<1x1x256xf32>
      tpu.vector_store %arg4[%c0_22, %c0_23, %c0_24], %30 {strides = array<i32>} : memref<1x1x256xf32, #tpu.memory_space<vmem>>, vector<1x1x256xf32>,
      %cst_25 = arith.constant 0.000000e+00 : f32
      %32 = vector.broadcast %cst_25 : f32 to vector<1x1x256xf32>
      %c0_26 = arith.constant 0 : index
      %c0_27 = arith.constant 0 : index
      %c0_28 = arith.constant 0 : index
      %33 = vector.load %arg5[%c0_26, %c0_27, %c0_28] : memref<1x1x256xf32, #tpu.memory_space<vmem>>, vector<1x1x256xf32>
      tpu.vector_store %arg5[%c0_26, %c0_27, %c0_28], %32 {strides = array<i32>} : memref<1x1x256xf32, #tpu.memory_space<vmem>>, vector<1x1x256xf32>,
    } else {
    }
    %c0 = arith.constant 0 : index
    %c0_1 = arith.constant 0 : index
    %c0_2 = arith.constant 0 : index
    %3 = vector.load %arg2[%c0, %c0_1, %c0_2] : memref<1x4x256xf32, #tpu.memory_space<vmem>>, vector<1x4x256xf32>
    %4 = vector.shape_cast %3 : vector<1x4x256xf32> to vector<4x256xf32>
    %cst = arith.constant dense<0xFF800000> : vector<256xf32>
    %5 = vector.multi_reduction <maximumf>, %4, %cst [0] : vector<4x256xf32> to vector<256xf32>
    %6 = vector.shape_cast %5 : vector<256xf32> to vector<1x256xf32>
    %cst_3 = arith.constant 5.000000e-01 : f32
    %7 = vector.broadcast %cst_3 : f32 to vector<1x256xf32>
    %8 = arith.mulf %7, %6 : vector<1x256xf32>
    %9 = math.tanh %8 : vector<1x256xf32>
    %cst_4 = arith.constant 5.000000e-01 : f32
    %10 = vector.broadcast %cst_4 : f32 to vector<1x256xf32>
    %11 = arith.mulf %10, %9 : vector<1x256xf32>
    %cst_5 = arith.constant 5.000000e-01 : f32
    %12 = vector.broadcast %cst_5 : f32 to vector<1x256xf32>
    %13 = arith.addf %11, %12 : vector<1x256xf32>
    %c0_6 = arith.constant 0 : index
    %c0_7 = arith.constant 0 : index
    %c0_8 = arith.constant 0 : index
    %14 = vector.load %arg3[%c0_6, %c0_7, %c0_8] : memref<1x1x256xf32, #tpu.memory_space<vmem>>, vector<1x1x256xf32>
    %15 = vector.shape_cast %14 : vector<1x1x256xf32> to vector<1x256xf32>
    %c0_9 = arith.constant 0 : index
    %c0_10 = arith.constant 0 : index
    %c0_11 = arith.constant 0 : index
    %16 = vector.load %arg4[%c0_9, %c0_10, %c0_11] : memref<1x1x256xf32, #tpu.memory_space<vmem>>, vector<1x1x256xf32>
    %17 = vector.shape_cast %16 : vector<1x1x256xf32> to vector<1x256xf32>
    %18 = arith.mulf %13, %15 : vector<1x256xf32>
    %19 = arith.addf %17, %18 : vector<1x256xf32>
    %c0_12 = arith.constant 0 : index
    %c0_13 = arith.constant 0 : index
    %c0_14 = arith.constant 0 : index
    %20 = vector.load %arg4[%c0_12, %c0_13, %c0_14] : memref<1x1x256xf32, #tpu.memory_space<vmem>>, vector<1x1x256xf32>
    %21 = vector.shape_cast %20 : vector<1x1x256xf32> to vector<1x256xf32>
    %22 = vector.shape_cast %19 : vector<1x256xf32> to vector<1x1x256xf32>
    tpu.vector_store %arg4[%c0_12, %c0_13, %c0_14], %22 {strides = array<i32>} : memref<1x1x256xf32, #tpu.memory_space<vmem>>, vector<1x1x256xf32>,
    %c0_15 = arith.constant 0 : index
    %c0_16 = arith.constant 0 : index
    %c0_17 = arith.constant 0 : index
    %23 = vector.load %arg5[%c0_15, %c0_16, %c0_17] : memref<1x1x256xf32, #tpu.memory_space<vmem>>, vector<1x1x256xf32>
    %24 = vector.shape_cast %23 : vector<1x1x256xf32> to vector<1x256xf32>
    %25 = arith.mulf %15, %15 : vector<1x256xf32>
    %26 = arith.addf %24, %25 : vector<1x256xf32>
    %c0_18 = arith.constant 0 : index
    %c0_19 = arith.constant 0 : index
    %c0_20 = arith.constant 0 : index
    %27 = vector.load %arg5[%c0_18, %c0_19, %c0_20] : memref<1x1x256xf32, #tpu.memory_space<vmem>>, vector<1x1x256xf32>
    %28 = vector.shape_cast %27 : vector<1x1x256xf32> to vector<1x256xf32>
    %29 = vector.shape_cast %26 : vector<1x256xf32> to vector<1x1x256xf32>
    tpu.vector_store %arg5[%c0_18, %c0_19, %c0_20], %29 {strides = array<i32>} : memref<1x1x256xf32, #tpu.memory_space<vmem>>, vector<1x1x256xf32>,
    return
  }
  func.func @transform_0(%arg0: i32, %arg1: i32) -> (i32, i32, i32) {
    %c0_i32 = arith.constant 0 : i32
    %c0_i32_0 = arith.constant 0 : i32
    return %arg0, %c0_i32, %arg1 : i32, i32, i32
  }
  func.func @transform_1(%arg0: i32, %arg1: i32) -> (i32, i32, i32) {
    %c0_i32 = arith.constant 0 : i32
    %c0_i32_0 = arith.constant 0 : i32
    return %arg0, %c0_i32, %arg1 : i32, i32, i32
  }
  func.func @transform_2(%arg0: i32, %arg1: i32) -> (i32, i32, i32) {
    %c0_i32 = arith.constant 0 : i32
    %c0_i32_0 = arith.constant 0 : i32
    %c0_i32_1 = arith.constant 0 : i32
    return %arg0, %c0_i32, %c0_i32_0 : i32, i32, i32
  }
  func.func @transform_3(%arg0: i32, %arg1: i32) -> (i32, i32, i32) {
    %c0_i32 = arith.constant 0 : i32
    %c0_i32_0 = arith.constant 0 : i32
    %c0_i32_1 = arith.constant 0 : i32
    return %arg0, %c0_i32, %c0_i32_0 : i32, i32, i32
  }
}

</mosaic_0001>

<llo_original>
// kernel: dice_loss_pallas.1
$region0: #{dice_loss_pallas.1}
  #allocation0 [shape = 'u32[]', space=smem, size = 0x4, offset = 0x4, fixed_abs, tag = 'smem constant byte address 0x4 - core index']
  #allocation1 [shape = 'u32[144,128]{1,0:T(1,128)}', space=vmem, size = 0x12000, scoped, tag = 'internal scratch']
  %s0 = inlined_call_operand.vmem [shape: f32[2,4,256], index: 0, kind: input, shape index: {}]
  %s1 = inlined_call_operand.vmem [shape: f32[2,1,256], index: 1, kind: input, shape index: {}]
  %s2 = inlined_call_operand.vmem [shape: f32[2,1,256], index: 2, kind: output, shape index: {0}]
  %s3 = inlined_call_operand.vmem [shape: f32[2,1,256], index: 3, kind: output, shape index: {1}]
  %4 = xla_tuple %s2, %s3
  %s5 = sld [smem:[#allocation0]]
  $region53: #{dice_loss_pallas.1} parent=0
    _
  %s7 = ssub.s32 1, %s5
  %s8 = scalar_select 0, %s7, %s5
  loop: start=0, step=1, limit=4
  $region2: #{dice_loss_pallas.1} parent=0 // loop_pre_header
    _
  $region3: #{dice_loss_pallas.1} parent=0 // loop_header
    %s10 = sphi 0, %s14
    %p11 = scmp.ge.s32.totalorder %s10, 4
    %s17 = sphi 0, %s29
    %s18 = sphi 0, %s25
    %s19 = sphi 0, %s17
    %s20 = sphi 0, %s18
    %s21 = sphi 0, %s19
    %s22 = sphi 0, %s20
    %s34 = sphi 0, %s36
    %s37 = sphi 0, %s34
    %s38 = sphi 0, %s37
    %s54 = sphi 0, %s38
    %s62 = sphi 0, %s64
    %s65 = sphi 0, %s62
    %s66 = sphi 0, %s65
    %s82 = sphi 0, %s66
    %s88 = sphi 0, %s90
    %s91 = sphi 0, %s88
    %s92 = sphi 0, %s91
    %s108 = sphi 0, %s92
    %s114 = sphi 0, %s116
    %s117 = sphi 0, %s114
    %s118 = sphi 0, %s117
    %s134 = sphi 0, %s118
  $region4: #{dice_loss_pallas.1} parent=0 // loop_header_branch
    %13 = sbr.rel (%p11) target = $region8
  $region5: #{dice_loss_pallas.1} parent=0 // loop_body
    %s15 = ssub.s32 %s10, 1
    %s16 = ssub.s32 %s10, 2
    %s23 = sadd.s32 1, %s18
    %p24 = scmp.ge.s32.totalorder %s23, 1
    %s25 = scalar_select %p24, 0, %s23
    %s26 = sadd.s32 1, %s17
    %s27 = scalar_select %p24, %s26, %s17
    %p28 = scmp.ge.s32.totalorder %s27, 2
    %s29 = scalar_select %p28, 0, %s27
    %s30 = ssub.s32 %s17, %s29
    %s31 = ssub.s32 %s18, %s25
    %s32 = sor.u32 %s30, %s31
    %p33 = scmp.eq.s32.totalorder %s32, 0
    %s35 = sadd.s32 %s34, 1
    %s36 = scalar_select %p33, %s34, %s35
    %p39 = pneg %p33
    %p40 = scmp.eq.s32.totalorder %s10, 1
    %p41 = por %p39, %p40
    %p42 = scmp.ne.s32.totalorder %s34, %s37
    %p43 = scmp.eq.s32.totalorder %s10, 0
    %p44 = por %p42, %p43
    %p45 = scmp.ne.s32.totalorder %s34, %s37
    %p46 = scmp.eq.s32.totalorder %s15, 1
    %p47 = por %p45, %p46
    %p48 = scmp.ne.s32.totalorder %s37, %s38
    %p49 = scmp.eq.s32.totalorder %s15, 0
    %p50 = por %p48, %p49
    %p51 = scmp.ne.s32.totalorder %s37, %s38
    %p52 = scmp.eq.s32.totalorder %s16, 1
    %p53 = por %p51, %p52
    %p55 = scmp.ne.s32.totalorder %s38, %s54
    %p56 = scmp.eq.s32.totalorder %s16, 0
    %p57 = por %p55, %p56
    %s58 = ssub.s32 %s17, %s29
    %s59 = ssub.s32 %s18, %s25
    %s60 = sor.u32 %s58, %s59
    %p61 = scmp.eq.s32.totalorder %s60, 0
    %s63 = sadd.s32 %s62, 1
    %s64 = scalar_select %p61, %s62, %s63
    %p67 = pneg %p61
    %p68 = scmp.eq.s32.totalorder %s10, 1
    %p69 = por %p67, %p68
    %p70 = scmp.ne.s32.totalorder %s62, %s65
    %p71 = scmp.eq.s32.totalorder %s10, 0
    %p72 = por %p70, %p71
    %p73 = scmp.ne.s32.totalorder %s62, %s65
    %p74 = scmp.eq.s32.totalorder %s15, 1
    %p75 = por %p73, %p74
    %p76 = scmp.ne.s32.totalorder %s65, %s66
    %p77 = scmp.eq.s32.totalorder %s15, 0
    %p78 = por %p76, %p77
    %p79 = scmp.ne.s32.totalorder %s65, %s66
    %p80 = scmp.eq.s32.totalorder %s16, 1
    %p81 = por %p79, %p80
    %p83 = scmp.ne.s32.totalorder %s66, %s82
    %p84 = scmp.eq.s32.totalorder %s16, 0
    %p85 = por %p83, %p84
    %s86 = ssub.s32 %s17, %s29
    %p87 = scmp.eq.s32.totalorder %s86, 0
    %s89 = sadd.s32 %s88, 1
    %s90 = scalar_select %p87, %s88, %s89
    %p93 = pneg %p87
    %p94 = scmp.eq.s32.totalorder %s10, 1
    %p95 = por %p93, %p94
    %p96 = scmp.ne.s32.totalorder %s88, %s91
    %p97 = scmp.eq.s32.totalorder %s10, 0
    %p98 = por %p96, %p97
    %p99 = scmp.ne.s32.totalorder %s88, %s91
    %p100 = scmp.eq.s32.totalorder %s15, 1
    %p101 = por %p99, %p100
    %p102 = scmp.ne.s32.totalorder %s91, %s92
    %p103 = scmp.eq.s32.totalorder %s15, 0
    %p104 = por %p102, %p103
    %p105 = scmp.ne.s32.totalorder %s91, %s92
    %p106 = scmp.eq.s32.totalorder %s16, 1
    %p107 = por %p105, %p106
    %p109 = scmp.ne.s32.totalorder %s92, %s108
    %p110 = scmp.eq.s32.totalorder %s16, 0
    %p111 = por %p109, %p110
    %s112 = ssub.s32 %s17, %s29
    %p113 = scmp.eq.s32.totalorder %s112, 0
    %s115 = sadd.s32 %s114, 1
    %s116 = scalar_select %p113, %s114, %s115
    %p119 = pneg %p113
    %p120 = scmp.eq.s32.totalorder %s10, 1
    %p121 = por %p119, %p120
    %p122 = scmp.ne.s32.totalorder %s114, %s117
    %p123 = scmp.eq.s32.totalorder %s10, 0
    %p124 = por %p122, %p123
    %p125 = scmp.ne.s32.totalorder %s114, %s117
    %p126 = scmp.eq.s32.totalorder %s15, 1
    %p127 = por %p125, %p126
    %p128 = scmp.ne.s32.totalorder %s117, %s118
    %p129 = scmp.eq.s32.totalorder %s15, 0
    %p130 = por %p128, %p129
    %p131 = scmp.ne.s32.totalorder %s117, %s118
    %p132 = scmp.eq.s32.totalorder %s16, 1
    %p133 = por %p131, %p132
    %p135 = scmp.ne.s32.totalorder %s118, %s134
    %p136 = scmp.eq.s32.totalorder %s16, 0
    %p137 = por %p135, %p136
    %p138 = scmp.le.s32.totalorder 1, %s10
    %p139 = scmp.lt.s32.totalorder %s10, 3
    %p140 = pnand %p138, %p139
    %p141 = pneg %p140
    // Predicated region
    $region9: #{dice_loss_pallas.1} parent=5 // pred_check
      _
    $region10: #{dice_loss_pallas.1} parent=5 // pred_check_branch
      %143 = sbr.rel (%p140) target = $region12
    $region11: #{dice_loss_pallas.1} parent=5 // pred_region
      %s144 = ssub.s32 %s10, 1
    $region12: #{dice_loss_pallas.1} parent=5 // pred_fallthru
      _
    %p145 = scmp.lt.s32.totalorder %s10, 2
    // Predicated region
    $region13: #{dice_loss_pallas.1} parent=5 // pred_check
      %p146 = pneg %p145
    $region14: #{dice_loss_pallas.1} parent=5 // pred_check_branch
      %148 = sbr.rel (%p146) target = $region16
    $region15: #{dice_loss_pallas.1} parent=5 // pred_region
      // Predicated region
      $region17: #{dice_loss_pallas.1} parent=15 // pred_check
        %p149 = pneg %p44
      $region18: #{dice_loss_pallas.1} parent=15 // pred_check_branch
        %151 = sbr.rel (%p149) target = $region20
      $region19: #{dice_loss_pallas.1} parent=15 // pred_region
        %s152 = smul.u32 2, %s18
        %p153 = scmp.lt.s32.totalorder %s17, 1
        %s154 = scalar_select %p153, %s17, 1
        %p155 = scmp.lt.s32.totalorder %s152, 1
        %s156 = scalar_select %p155, %s152, 1
        %s157 = smul.addr %s154, 2
        %s158 = sadd.s32 %s156, %s157
        %s159 = smul.addr %s158, 4
        %s160 = scalar_lea.vmem %s0, %s159
        %s161 = smul.u32 2, %s18
      $region20: #{dice_loss_pallas.1} parent=15 // pred_fallthru
        _
      // Predicated region
      $region21: #{dice_loss_pallas.1} parent=15 // pred_check
        %p162 = pneg %p72
      $region22: #{dice_loss_pallas.1} parent=15 // pred_check_branch
        %164 = sbr.rel (%p162) target = $region24
      $region23: #{dice_loss_pallas.1} parent=15 // pred_region
        %s165 = smul.u32 2, %s18
        %p166 = scmp.lt.s32.totalorder %s17, 1
        %s167 = scalar_select %p166, %s17, 1
        %p168 = scmp.lt.s32.totalorder %s165, 1
        %s169 = scalar_select %p168, %s165, 1
        %s170 = smul.addr %s167, 2
        %s171 = sadd.s32 %s169, %s170
        %s172 = scalar_lea.vmem %s1, %s171
        %s173 = smul.u32 2, %s18
      $region24: #{dice_loss_pallas.1} parent=15 // pred_fallthru
        _
    $region16: #{dice_loss_pallas.1} parent=5 // pred_fallthru
      _
    %p174 = scmp.le.s32.totalorder 1, %s10
    %p175 = scmp.lt.s32.totalorder %s10, 3
    %p176 = pnand %p174, %p175
    %p177 = pneg %p176
    // Predicated region
    $region25: #{dice_loss_pallas.1} parent=5 // pred_check
      _
    $region26: #{dice_loss_pallas.1} parent=5 // pred_check_branch
      %179 = sbr.rel (%p176) target = $region28
    $region27: #{dice_loss_pallas.1} parent=5 // pred_region
      %s180 = ssub.s32 %s10, 1
      %s181 = smul.u32 2, %s20
      %p182 = scmp.lt.s32.totalorder %s19, 1
      %s183 = scalar_select %p182, %s19, 1
      %p184 = scmp.lt.s32.totalorder %s181, 1
      %s185 = scalar_select %p184, %s181, 1
      %s186 = smul.addr %s183, 2
      %s187 = sadd.s32 %s185, %s186
      %s188 = smul.addr %s187, 4
      %s189 = scalar_lea.vmem %s0, %s188
      %p190 = pneg %p50
      %p191 = pneg %p47
      %s192 = smul.u32 2, %s20
      %p193 = scmp.lt.s32.totalorder %s19, 1
      %s194 = scalar_select %p193, %s19, 1
      %p195 = scmp.lt.s32.totalorder %s192, 1
      %s196 = scalar_select %p195, %s192, 1
      %s197 = smul.addr %s194, 2
      %s198 = sadd.s32 %s196, %s197
      %s199 = scalar_lea.vmem %s1, %s198
      %p200 = pneg %p78
      %p201 = pneg %p75
      %p202 = pneg %p104
      %p203 = pneg %p101
      %p204 = scmp.lt.s32.totalorder %s19, 1
      %s205 = scalar_select %p204, %s19, 1
      %s206 = smul.addr %s205, 2
      %s207 = scalar_lea.vmem %s2, %s206
      %p208 = pneg %p130
      %p209 = pneg %p127
      %p210 = scmp.lt.s32.totalorder %s19, 1
      %s211 = scalar_select %p210, %s19, 1
      %s212 = smul.addr %s211, 2
      %s213 = scalar_lea.vmem %s3, %s212
      %s214 = smul.u32 2, %s20
      %p215 = scmp.lt.s32.totalorder %s19, 1
      %s216 = scalar_select %p215, %s19, 1
      %p217 = scmp.lt.s32.totalorder %s214, 1
      %s218 = scalar_select %p217, %s214, 1
      %s219 = smul.addr %s216, 2
      %s220 = sadd.s32 %s218, %s219
      %s221 = smul.addr %s220, 4
      %s222 = scalar_lea.vmem %s0, %s221
      %s223 = smul.u32 2, %s20
      %s224 = smul.u32 2, %s20
      %p225 = scmp.lt.s32.totalorder %s19, 1
      %s226 = scalar_select %p225, %s19, 1
      %p227 = scmp.lt.s32.totalorder %s224, 1
      %s228 = scalar_select %p227, %s224, 1
      %s229 = smul.addr %s226, 2
      %s230 = sadd.s32 %s228, %s229
      %s231 = scalar_lea.vmem %s1, %s230
      %s232 = smul.u32 2, %s20
      %p233 = scmp.lt.s32.totalorder %s19, 1
      %s234 = scalar_select %p233, %s19, 1
      %s235 = smul.addr %s234, 2
      %s236 = scalar_lea.vmem %s2, %s235
      %p237 = scmp.lt.s32.totalorder %s19, 1
      %s238 = scalar_select %p237, %s19, 1
      %s239 = smul.addr %s238, 2
      %s240 = scalar_lea.vmem %s3, %s239
      %p241 = scmp.eq.s32.totalorder %s20, 0
      // Predicated region
      $region29: #{dice_loss_pallas.1} parent=27 // pred_check
        %p242 = pneg %p241
      $region30: #{dice_loss_pallas.1} parent=27 // pred_check_branch
        %244 = sbr.rel (%p242) target = $region32
      $region31: #{dice_loss_pallas.1} parent=27 // pred_region
        %v245 = vlaneseq
        %vm246 = vcmp.ge.s32.totalorder %v245, 0
        %vm247 = vcmp.lt.s32.totalorder %v245, 256
        %vm248 = vmand %vm246, %vm247
        %249 = vst.msk [vmem:[%s236] sm:$0x3] %vm248, 0.0
        %250 = vst.msk [vmem:[%s240] sm:$0x3] %vm248, 0.0
      $region32: #{dice_loss_pallas.1} parent=27 // pred_fallthru
        _
      %v251 = vld [vmem:[%s222] sm:$0xff]
      %v253 = vcombine.high %v251, %v251
      %vm255 = vcmask 1043456
      %v256 = vsel %vm255, %v251, -inf
      %v257 = vrot.slane %v256, 4
      %v258 = vmax.f32 %v256, %v257
      %v259 = vrot.slane %v258, 2
      %v260 = vmax.f32 %v258, %v259
      %v261 = vrot.slane %v260, 1
      %v262 = vmax.f32 %v260, %v261
      %v263 = vsel %vm255, %v253, -inf
      %v264 = vrot.slane %v263, 4
      %v265 = vmax.f32 %v263, %v264
      %v266 = vrot.slane %v265, 2
      %v267 = vmax.f32 %v265, %v266
      %v268 = vrot.slane %v267, 1
      %v269 = vmax.f32 %v267, %v268
      %v270 = vmul.f32 %v262, 0.5
      %v271 = vmul.f32 %v269, 0.5
      %v272 = vtanh.pop %v270
      %v273 = vtanh.pop %v271
      %v274 = vmul.f32 %v272, 0.5
      %v275 = vmul.f32 %v273, 0.5
      %v276 = vadd.f32 %v274, 0.5
      %v277 = vadd.f32 %v275, 0.5
      %v278 = vld [vmem:[%s231] sm:$0x3]
      %v279 = vld [vmem:[%s236] sm:$0x3]
      %v281 = vlaneseq
      %v282 = vshrl.u32 %v281, 7
      %v283 = vsub.s32 0, %v282
      %v284 = vrot.slane %v278, %v283
      %v285 = vlaneseq
      %v286 = vshrl.u32 %v285, 7
      %v287 = vsub.s32 1, %v286
      %v288 = vrot.slane %v278, %v287
      %v291 = vmul.f32 %v276, %v284
      %v292 = vmul.f32 %v277, %v288
      %v295 = vcombine.low %v291, %v292
      %v297 = vunpack.c.l.s4 1966171168
      %v298 = vunpack.c.0.s8 %v297
      %v299 = vlaneseq
      %v300 = vshrl.u32 %v299, 7
      %v301 = vsub.s32 %v298, %v300
      %v302 = vrot.slane %v295, %v301
      %v304 = vunpack.c.l.s4 1966171168
      %v305 = vunpack.c.0.s8 %v304
      %v306 = vlaneseq
      %v307 = vshrl.u32 %v306, 7
      %v308 = vsub.s32 %v305, %v307
      %v309 = vrot.slane %v302, %v308
      %v311 = vadd.f32 %v279, %v309
      %v312 = vlaneseq
      %vm313 = vcmp.ge.s32.totalorder %v312, 0
      %vm314 = vcmp.lt.s32.totalorder %v312, 256
      %vm315 = vmand %vm313, %vm314
      %316 = vst.msk [vmem:[%s236] sm:$0x3] %vm315, %v311
      %v317 = vld [vmem:[%s240] sm:$0x3]
      %v318 = vmul.f32 %v278, %v278
      %v319 = vadd.f32 %v317, %v318
      %320 = vst.msk [vmem:[%s240] sm:$0x3] %vm315, %v319
      %p321 = scmp.lt.s32.totalorder %s19, 1
      %s322 = scalar_select %p321, %s19, 1
      %s323 = smul.addr %s322, 2
      %s324 = scalar_lea.vmem %s2, %s323
      %p325 = scmp.lt.s32.totalorder %s19, 1
      %s326 = scalar_select %p325, %s19, 1
      %s327 = smul.addr %s326, 2
      %s328 = scalar_lea.vmem %s3, %s327
      // Predicated region
      $region33: #{dice_loss_pallas.1} parent=27 // pred_check
        %p329 = pneg %p101
      $region34: #{dice_loss_pallas.1} parent=27 // pred_check_branch
        %331 = sbr.rel (%p329) target = $region36
      $region35: #{dice_loss_pallas.1} parent=27 // pred_region
        _
      $region36: #{dice_loss_pallas.1} parent=27 // pred_fallthru
        _
      // Predicated region
      $region37: #{dice_loss_pallas.1} parent=27 // pred_check
        %p332 = pneg %p127
      $region38: #{dice_loss_pallas.1} parent=27 // pred_check_branch
        %334 = sbr.rel (%p332) target = $region40
      $region39: #{dice_loss_pallas.1} parent=27 // pred_region
        _
      $region40: #{dice_loss_pallas.1} parent=27 // pred_fallthru
        _
    $region28: #{dice_loss_pallas.1} parent=5 // pred_fallthru
      _
    %p335 = scmp.le.s32.totalorder 2, %s10
    // Predicated region
    $region41: #{dice_loss_pallas.1} parent=5 // pred_check
      %p336 = pneg %p335
    $region42: #{dice_loss_pallas.1} parent=5 // pred_check_branch
      %338 = sbr.rel (%p336) target = $region44
    $region43: #{dice_loss_pallas.1} parent=5 // pred_region
      %s339 = ssub.s32 %s10, 2
      // Predicated region
      $region45: #{dice_loss_pallas.1} parent=43 // pred_check
        %p340 = pneg %p107
      $region46: #{dice_loss_pallas.1} parent=43 // pred_check_branch
        %342 = sbr.rel (%p340) target = $region48
      $region47: #{dice_loss_pallas.1} parent=43 // pred_region
        %p343 = scmp.lt.s32.totalorder %s21, 1
        %s344 = scalar_select %p343, %s21, 1
        %s345 = smul.addr %s344, 2
        %s346 = scalar_lea.vmem %s2, %s345
      $region48: #{dice_loss_pallas.1} parent=43 // pred_fallthru
        _
      // Predicated region
      $region49: #{dice_loss_pallas.1} parent=43 // pred_check
        %p347 = pneg %p133
      $region50: #{dice_loss_pallas.1} parent=43 // pred_check_branch
        %349 = sbr.rel (%p347) target = $region52
      $region51: #{dice_loss_pallas.1} parent=43 // pred_region
        %p350 = scmp.lt.s32.totalorder %s21, 1
        %s351 = scalar_select %p350, %s21, 1
        %s352 = smul.addr %s351, 2
        %s353 = scalar_lea.vmem %s3, %s352
      $region52: #{dice_loss_pallas.1} parent=43 // pred_fallthru
        _
    $region44: #{dice_loss_pallas.1} parent=5 // pred_fallthru
      _
  $region6: #{dice_loss_pallas.1} parent=0 // loop_footer
    %s14 = sadd.s32 1, %s10
  $region7: #{dice_loss_pallas.1} parent=0 // loop_footer_branch
    %9 = sbr.rel target = $region3
  $region8: #{dice_loss_pallas.1} parent=0 // loop_exit
    _

</llo_original>
